<compile_context>
chip_gen: v5e
topology: v5e:2x2
jax: 0.10.0
libtpu: 0.0.40
codegen_flags: <defaults>
</compile_context>

<pallas_src>
import functools

import jax
import jax.numpy as jnp
from jax import lax
from jax.experimental import pallas as pl
from jax.experimental.pallas import tpu as pltpu


def _round_up(x: int, m: int) -> int:
    return (x + m - 1) // m * m


def _supcon_kernel(i_tab_ref, k_tab_ref,              # scalar prefetch (SMEM)
                   f_row_ref, f_col_ref,              # (t, d_pad) feature tiles
                   lab_row_ref, lab_col_ref,          # (t, 1), (1, t) int32
                   dacc_row_ref,                      # (n_t, t, 128) f32 out
                   dacc_col_ref,                      # (n_t, 8, t)   f32 out
                   pacc_ref,                          # (8, 128)      f32 out
                   *, inv_temp: float):
    s = pl.program_id(0)
    i = i_tab_ref[s]                                  # row-tile index
    k = k_tab_ref[s]                                  # col-tile index (k >= i)
    t = f_row_ref.shape[0]

    @pl.when(s == 0)
    def _init():
        dacc_row_ref[...] = jnp.zeros_like(dacc_row_ref)
        dacc_col_ref[...] = jnp.zeros_like(dacc_col_ref)
        pacc_ref[...] = jnp.zeros_like(pacc_ref)

    # Gram tile in NT form (contract feature dims of both operands) -> MXU,
    # f32 accumulation.  1/T is applied to the f32 result (one VPU mul).
    sim = lax.dot_general(
        f_row_ref[...], f_col_ref[...],
        dimension_numbers=(((1,), (1,)), ((), ())),
        preferred_element_type=jnp.float32)           # (t, t) f32
    sim_c = jnp.maximum(sim * jnp.float32(inv_temp), -20.0)

    # Positive-pair mask is just the label equality; the diagonal (which the
    # PyTorch mask excludes) and the zero-padded rows/cols are corrected
    # analytically in the wrapper, so no iota / validity work here.
    pos_mask = lab_row_ref[...] == lab_col_ref[...]   # (t, t) bool

    neg_exp = jnp.where(pos_mask, 1.0, jnp.exp(sim_c))   # exp(0)=1 for positives
    pos_val = jnp.where(pos_mask, sim_c, 0.0)

    # --- denominator partials (lane-dense vreg adds only, no XLU) ----------
    # Row direction: sum over columns, folded onto 128 lanes.
    row_part = neg_exp.reshape(t, t // 128, 128).sum(axis=1)        # (t, 128)
    dacc_row_ref[i] = dacc_row_ref[i] + row_part

    off_diag = i != k

    # Mirror direction (symmetry): sum over rows, folded onto 8 sublanes.
    # Only off-diagonal tiles, otherwise it would double count.
    @pl.when(off_diag)
    def _mirror():
        col_part = neg_exp.reshape(t // 8, 8, t).sum(axis=0)        # (8, t)
        dacc_col_ref[k] = dacc_col_ref[k] + col_part

    # --- positive-similarity partial (only its global sum is needed) -------
    pos_fold = pos_val.reshape(t, t // 128, 128).sum(axis=1)        # (t, 128)
    pos_fold = pos_fold.reshape(t // 8, 8, 128).sum(axis=0)         # (8, 128)
    factor = jnp.where(off_diag, jnp.float32(2.0), jnp.float32(1.0))
    pacc_ref[...] = pacc_ref[...] + factor * pos_fold


def supcon_loss(features: jax.Array, labels: jax.Array,
                temperature: float = 0.07, *, block: int = 512,
                mxu_dtype=jnp.bfloat16) -> jax.Array:
    """features: (B, D) float, labels: (B,) int -> scalar float32 loss.

    mxu_dtype: dtype fed to the MXU (default bf16; pass jnp.float32 for a
    bit-closer match to the full-precision PyTorch reference).
    """
    b, d = features.shape
    inv_t = 1.0 / float(temperature)

    mxu_dt = jnp.dtype(mxu_dtype)
    itemsize = mxu_dt.itemsize
    d_pad = _round_up(d, 128)

    # ---- VMEM budget / tile selection (generation-aware: v7x has 64 MiB) ----
    try:
        vmem_cap = int(pltpu.get_tpu_info().vmem_capacity_bytes)
    except Exception:  # pragma: no cover - conservative fallback
        vmem_cap = 64 * 1024 * 1024
    vmem_limit = max(32 * 1024 * 1024,
                     min(int(vmem_cap * 0.7), 96 * 1024 * 1024))

    # Tiles are always multiples of 128 so the in-kernel lane folds are
    # layout-free; small batches just use a single 128-wide tile.
    t = max(128, _round_up(min(block, _round_up(b, 128)), 128))

    def _vmem_use(tt: int) -> int:
        feat = 2 * 2 * tt * d_pad * itemsize      # 2 inputs x double buffer
        inter = 6 * tt * tt * 4                   # (t,t) f32 temporaries
        return feat + inter

    while t > 128 and _vmem_use(t) > vmem_limit * 0.75:
        t -= 128

    b_pad = _round_up(b, t)
    n_t = b_pad // t
    n_pairs = n_t * (n_t + 1) // 2

    # ---- pad + cast inputs ----
    f = features
    if b_pad != b or d_pad != d:
        f = jnp.pad(f, ((0, b_pad - b), (0, d_pad - d)))
    f_mx = f.astype(mxu_dt)

    lab = labels.reshape(-1).astype(jnp.int32)
    if b_pad != b:
        # Sentinel that never matches a real label (robust to negative labels;
        # only INT32_MIN labels would wrap).
        sentinel = jnp.min(lab) - 1
        lab = jnp.concatenate(
            [lab, jnp.full((b_pad - b,), sentinel, dtype=jnp.int32)])
    lab_row = lab.reshape(b_pad, 1)
    lab_col = lab.reshape(1, b_pad)

    # ---- upper-triangular tile-pair schedule (row tile stays resident) ----
    pairs_i, pairs_k = [], []
    for ii in range(n_t):
        for kk in range(ii, n_t):
            pairs_i.append(ii)
            pairs_k.append(kk)
    i_tab = jnp.asarray(pairs_i, dtype=jnp.int32)
    k_tab = jnp.asarray(pairs_k, dtype=jnp.int32)

    cost = pl.CostEstimate(
        flops=int(2 * n_pairs * t * t * d_pad),
        transcendentals=int(n_pairs * t * t),
        bytes_accessed=int(n_pairs * 2 * t * d_pad * itemsize
                           + b_pad * (128 + 8) * 4 + 8 * 128 * 4),
    )

    kernel = functools.partial(_supcon_kernel, inv_temp=inv_t)

    dacc_row, dacc_col, pacc = pl.pallas_call(
        kernel,
        out_shape=(jax.ShapeDtypeStruct((n_t, t, 128), jnp.float32),
                   jax.ShapeDtypeStruct((n_t, 8, t), jnp.float32),
                   jax.ShapeDtypeStruct((8, 128), jnp.float32)),
        grid_spec=pltpu.PrefetchScalarGridSpec(
            num_scalar_prefetch=2,
            grid=(n_pairs,),
            in_specs=[
                pl.BlockSpec((t, d_pad), lambda s, it, kt: (it[s], 0)),  # rows
                pl.BlockSpec((t, d_pad), lambda s, it, kt: (kt[s], 0)),  # cols
                pl.BlockSpec((t, 1), lambda s, it, kt: (it[s], 0)),      # lab r
                pl.BlockSpec((1, t), lambda s, it, kt: (0, kt[s])),      # lab c
            ],
            out_specs=[
                pl.BlockSpec((n_t, t, 128), lambda s, it, kt: (0, 0, 0)),
                pl.BlockSpec((n_t, 8, t), lambda s, it, kt: (0, 0, 0)),
                pl.BlockSpec((8, 128), lambda s, it, kt: (0, 0)),
            ],
        ),
        compiler_params=pltpu.CompilerParams(
            dimension_semantics=("arbitrary",),
            vmem_limit_bytes=int(vmem_limit)),
        cost_estimate=cost,
    )(i_tab, k_tab, f_mx, f_mx, lab_row, lab_col)

    # ---- tiny final reductions + analytic corrections (O(B) work) ----
    row_tot = jnp.sum(dacc_row, axis=-1).reshape(b_pad)
    col_tot = jnp.sum(dacc_col, axis=1).reshape(b_pad)
    denom_raw = (row_tot + col_tot)[:b]

    # Diagonal similarity at the same precision the MXU saw, so the kernel's
    # diagonal contributions cancel (almost) exactly.
    diag = jnp.sum(f_mx[:b].astype(jnp.float32) ** 2, axis=1) * inv_t
    diag_c = jnp.maximum(diag, -20.0)

    # Kernel counted: the diagonal as a positive (+1 per row) and each padded
    # column as exp(clamp(0)) = 1 per row (+ (b_pad - b)).  Swap in the true
    # diagonal term and drop the padding ones.
    denom = denom_raw - 1.0 - float(b_pad - b) + jnp.exp(diag_c) + 1e-8
    # Kernel's positive sum included the diagonal clamp(sim_ii); remove it.
    pos_total = jnp.sum(pacc) - jnp.sum(diag_c)

    loss = jnp.mean(jnp.log(denom)) - pos_total / float(b * b)
    return loss.astype(jnp.float32)


def _supcon_loss_ref(features, labels, temperature=0.07):
    """Pure-JAX reference mirroring the PyTorch forward exactly."""
    b = features.shape[0]
    lab = labels.reshape(-1, 1)
    sim = jnp.matmul(features, features.T,
                     precision=lax.Precision.HIGHEST) / temperature
    mask = (lab == lab.T).astype(jnp.float32) - jnp.eye(b, dtype=jnp.float32)
    pos = jnp.maximum(mask * sim, -20.0)
    neg = jnp.maximum((1.0 - mask) * sim, -20.0)
    pos_exp = jnp.exp(pos)
    neg_exp = jnp.exp(neg)
    denom = jnp.sum(neg_exp, axis=1) + 1e-8
    return -jnp.mean(jnp.log(pos_exp / denom))


if __name__ == "__main__":
    key = jax.random.PRNGKey(0)
    k1, k2, k3, k4, k5, k6 = jax.random.split(key, 6)

    # --- Test 1: small batch, single tile, f32 MXU path (tight tolerance).
    # Features are L2-normalized, as SupCon expects, so exp(sim/0.07) is finite
    # (the module itself has no max-subtraction stabilization).
    B, D = 8, 32
    feats = jax.random.normal(k1, (B, D), dtype=jnp.float32)
    feats = feats / jnp.linalg.norm(feats, axis=1, keepdims=True)
    labels = jax.random.randint(k2, (B,), 0, 3, dtype=jnp.int32)

    loss = jax.block_until_ready(
        supcon_loss(feats, labels, temperature=0.07, mxu_dtype=jnp.float32))
    ref = _supcon_loss_ref(feats, labels, temperature=0.07)
    assert jnp.allclose(loss, ref, rtol=1e-4, atol=1e-4), (loss, ref)

    # --- Test 2: multi-tile grid, padding, symmetric (mirror) accumulation,
    # default bf16 MXU path.
    B2, D2 = 200, 96
    feats2 = jax.random.normal(k3, (B2, D2), dtype=jnp.float32)
    feats2 = feats2 / jnp.linalg.norm(feats2, axis=1, keepdims=True)
    labels2 = jax.random.randint(k4, (B2,), 0, 6, dtype=jnp.int32)

    loss2 = jax.block_until_ready(
        supcon_loss(feats2, labels2, temperature=0.07, block=128))
    # Tight check against the reference evaluated on bf16-rounded features
    # (isolates the intentional bf16 quantization from kernel logic) ...
    feats2_bf = feats2.astype(jnp.bfloat16).astype(jnp.float32)
    ref2_bf = _supcon_loss_ref(feats2_bf, labels2, temperature=0.07)
    assert jnp.allclose(loss2, ref2_bf, rtol=1e-3, atol=1e-3), (loss2, ref2_bf)
    # ... and a loose check against the full-precision reference.
    ref2 = _supcon_loss_ref(feats2, labels2, temperature=0.07)
    assert jnp.allclose(loss2, ref2, rtol=3e-2, atol=3e-2), (loss2, ref2)

    # --- Test 3: three row tiles (6 tile pairs), padding, f32 MXU path.
    B3, D3 = 300, 64
    feats3 = jax.random.normal(k5, (B3, D3), dtype=jnp.float32)
    feats3 = feats3 / jnp.linalg.norm(feats3, axis=1, keepdims=True)
    labels3 = jax.random.randint(k6, (B3,), 0, 10, dtype=jnp.int32)

    loss3 = jax.block_until_ready(
        supcon_loss(feats3, labels3, temperature=0.07, block=128,
                    mxu_dtype=jnp.float32))
    ref3 = _supcon_loss_ref(feats3, labels3, temperature=0.07)
    assert jnp.allclose(loss3, ref3, rtol=1e-4, atol=1e-4), (loss3, ref3)

    print("KERNEL_OK")
</pallas_src>

<mosaic_0001>
module attributes {stable_mosaic.version = 11 : i64} {
  func.func @_supcon_kernel(%arg0: i32, %arg1: memref<1xi32, #tpu.memory_space<smem>>, %arg2: memref<1xi32, #tpu.memory_space<smem>>, %arg3: memref<128x128xf32, #tpu.memory_space<vmem>>, %arg4: memref<128x128xf32, #tpu.memory_space<vmem>>, %arg5: memref<128x1xi32, #tpu.memory_space<vmem>>, %arg6: memref<1x128xi32, #tpu.memory_space<vmem>>, %arg7: memref<1x128x128xf32, #tpu.memory_space<vmem>>, %arg8: memref<1x8x128xf32, #tpu.memory_space<vmem>>, %arg9: memref<8x128xf32, #tpu.memory_space<vmem>>) attributes {dimension_semantics = [#tpu.dimension_semantics<arbitrary>], iteration_bounds = array<i64: 1>, scalar_prefetch = 2 : i64, scratch_operands = 0 : i64, tpu.core_type = #tpu.core_type<tc>, window_params = [{transform_indices = @transform_0, window_bounds = array<i64: 128, 128>}, {transform_indices = @transform_1, window_bounds = array<i64: 128, 128>}, {transform_indices = @transform_2, window_bounds = array<i64: 128, 1>}, {transform_indices = @transform_3, window_bounds = array<i64: 1, 128>}, {pipeline_mode = #tpu.pipeline_mode<synchronous>, transform_indices = @transform_4, window_bounds = array<i64: 1, 128, 128>}, {pipeline_mode = #tpu.pipeline_mode<synchronous>, transform_indices = @transform_5, window_bounds = array<i64: 1, 8, 128>}, {pipeline_mode = #tpu.pipeline_mode<synchronous>, transform_indices = @transform_6, window_bounds = array<i64: 8, 128>}]} {
    %0 = arith.index_cast %arg0 : i32 to index
    %1 = memref.load %arg1[%0] : memref<1xi32, #tpu.memory_space<smem>>
    %2 = arith.index_cast %arg0 : i32 to index
    %3 = memref.load %arg2[%2] : memref<1xi32, #tpu.memory_space<smem>>
    %c0_i32 = arith.constant 0 : i32
    %4 = arith.cmpi eq, %arg0, %c0_i32 : i32
    %5 = arith.extui %4 : i1 to i32
    %c0_i32_0 = arith.constant 0 : i32
    %6 = arith.cmpi ne, %5, %c0_i32_0 : i32
    scf.if %6 {
      %cst_26 = arith.constant 0.000000e+00 : f32
      %47 = vector.broadcast %cst_26 : f32 to vector<1x128x128xf32>
      %c0_27 = arith.constant 0 : index
      %c0_28 = arith.constant 0 : index
      %c0_29 = arith.constant 0 : index
      %48 = vector.load %arg7[%c0_27, %c0_28, %c0_29] : memref<1x128x128xf32, #tpu.memory_space<vmem>>, vector<1x128x128xf32>
      tpu.vector_store %arg7[%c0_27, %c0_28, %c0_29], %47 {strides = array<i32>} : memref<1x128x128xf32, #tpu.memory_space<vmem>>, vector<1x128x128xf32>,
      %cst_30 = arith.constant 0.000000e+00 : f32
      %49 = vector.broadcast %cst_30 : f32 to vector<1x8x128xf32>
      %c0_31 = arith.constant 0 : index
      %c0_32 = arith.constant 0 : index
      %c0_33 = arith.constant 0 : index
      %50 = vector.load %arg8[%c0_31, %c0_32, %c0_33] : memref<1x8x128xf32, #tpu.memory_space<vmem>>, vector<1x8x128xf32>
      tpu.vector_store %arg8[%c0_31, %c0_32, %c0_33], %49 {strides = array<i32>} : memref<1x8x128xf32, #tpu.memory_space<vmem>>, vector<1x8x128xf32>,
      %cst_34 = arith.constant 0.000000e+00 : f32
      %51 = vector.broadcast %cst_34 : f32 to vector<8x128xf32>
      %c0_35 = arith.constant 0 : index
      %c0_36 = arith.constant 0 : index
      %52 = vector.load %arg9[%c0_35, %c0_36] : memref<8x128xf32, #tpu.memory_space<vmem>>, vector<8x128xf32>
      tpu.vector_store %arg9[%c0_35, %c0_36], %51 {strides = array<i32>} : memref<8x128xf32, #tpu.memory_space<vmem>>, vector<8x128xf32>,
    } else {
    }
    %c0 = arith.constant 0 : index
    %c0_1 = arith.constant 0 : index
    %7 = vector.load %arg3[%c0, %c0_1] : memref<128x128xf32, #tpu.memory_space<vmem>>, vector<128x128xf32>
    %c0_2 = arith.constant 0 : index
    %c0_3 = arith.constant 0 : index
    %8 = vector.load %arg4[%c0_2, %c0_3] : memref<128x128xf32, #tpu.memory_space<vmem>>, vector<128x128xf32>
    %cst = arith.constant dense<0.000000e+00> : vector<128x128xf32>
    %9 = tpu.matmul %7, %8, %cst {dimension_numbers = #tpu.dot_dimension_numbers<[1], [1], [0], [0], [0, 0, 1, 0], [], []>} : vector<128x128xf32>, vector<128x128xf32>, vector<128x128xf32> -> vector<128x128xf32>
    %cst_4 = arith.constant 14.2857141 : f32
    %10 = vector.broadcast %cst_4 : f32 to vector<128x128xf32>
    %11 = arith.mulf %9, %10 : vector<128x128xf32>
    %cst_5 = arith.constant -2.000000e+01 : f32
    %12 = vector.broadcast %cst_5 : f32 to vector<128x128xf32>
    %13 = arith.maximumf %11, %12 : vector<128x128xf32>
    %c0_6 = arith.constant 0 : index
    %c0_7 = arith.constant 0 : index
    %14 = vector.load %arg5[%c0_6, %c0_7] : memref<128x1xi32, #tpu.memory_space<vmem>>, vector<128x1xi32>
    %c0_8 = arith.constant 0 : index
    %c0_9 = arith.constant 0 : index
    %15 = vector.load %arg6[%c0_8, %c0_9] : memref<1x128xi32, #tpu.memory_space<vmem>>, vector<1x128xi32>
    %16 = vector.broadcast %14 : vector<128x1xi32> to vector<128x128xi32>
    %17 = vector.broadcast %15 : vector<1x128xi32> to vector<128x128xi32>
    %18 = arith.cmpi eq, %16, %17 : vector<128x128xi32>
    %19 = math.exp %13 : vector<128x128xf32>
    %cst_10 = arith.constant 1.000000e+00 : f32
    %20 = vector.broadcast %cst_10 : f32 to vector<128x128xf32>
    %21 = arith.select %18, %20, %19 : vector<128x128xi1>, vector<128x128xf32>
    %cst_11 = arith.constant 0.000000e+00 : f32
    %22 = vector.broadcast %cst_11 : f32 to vector<128x128xf32>
    %23 = arith.select %18, %13, %22 : vector<128x128xi1>, vector<128x128xf32>
    %24 = vector.shape_cast %21 : vector<128x128xf32> to vector<128x1x128xf32>
    %cst_12 = arith.constant dense<0.000000e+00> : vector<128x128xf32>
    %25 = vector.multi_reduction <add>, %24, %cst_12 [1] : vector<128x1x128xf32> to vector<128x128xf32>
    %26 = arith.index_cast %1 : i32 to index
    %c0_13 = arith.constant 0 : index
    %c0_14 = arith.constant 0 : index
    %27 = vector.load %arg7[%26, %c0_13, %c0_14] : memref<1x128x128xf32, #tpu.memory_space<vmem>>, vector<1x128x128xf32>
    %28 = vector.shape_cast %27 : vector<1x128x128xf32> to vector<128x128xf32>
    %29 = arith.addf %28, %25 : vector<128x128xf32>
    %30 = arith.index_cast %1 : i32 to index
    %c0_15 = arith.constant 0 : index
    %c0_16 = arith.constant 0 : index
    %31 = vector.load %arg7[%30, %c0_15, %c0_16] : memref<1x128x128xf32, #tpu.memory_space<vmem>>, vector<1x128x128xf32>
    %32 = vector.shape_cast %31 : vector<1x128x128xf32> to vector<128x128xf32>
    %33 = vector.shape_cast %29 : vector<128x128xf32> to vector<1x128x128xf32>
    tpu.vector_store %arg7[%30, %c0_15, %c0_16], %33 {strides = array<i32>} : memref<1x128x128xf32, #tpu.memory_space<vmem>>, vector<1x128x128xf32>,
    %34 = arith.cmpi ne, %1, %3 : i32
    %35 = arith.extui %34 : i1 to i32
    %c0_i32_17 = arith.constant 0 : i32
    %36 = arith.cmpi ne, %35, %c0_i32_17 : i32
    scf.if %36 {
      %47 = vector.shape_cast %21 : vector<128x128xf32> to vector<16x8x128xf32>
      %cst_26 = arith.constant dense<0.000000e+00> : vector<8x128xf32>
      %48 = vector.multi_reduction <add>, %47, %cst_26 [0] : vector<16x8x128xf32> to vector<8x128xf32>
      %49 = arith.index_cast %3 : i32 to index
      %c0_27 = arith.constant 0 : index
      %c0_28 = arith.constant 0 : index
      %50 = vector.load %arg8[%49, %c0_27, %c0_28] : memref<1x8x128xf32, #tpu.memory_space<vmem>>, vector<1x8x128xf32>
      %51 = vector.shape_cast %50 : vector<1x8x128xf32> to vector<8x128xf32>
      %52 = arith.addf %51, %48 : vector<8x128xf32>
      %53 = arith.index_cast %3 : i32 to index
      %c0_29 = arith.constant 0 : index
      %c0_30 = arith.constant 0 : index
      %54 = vector.load %arg8[%53, %c0_29, %c0_30] : memref<1x8x128xf32, #tpu.memory_space<vmem>>, vector<1x8x128xf32>
      %55 = vector.shape_cast %54 : vector<1x8x128xf32> to vector<8x128xf32>
      %56 = vector.shape_cast %52 : vector<8x128xf32> to vector<1x8x128xf32>
      tpu.vector_store %arg8[%53, %c0_29, %c0_30], %56 {strides = array<i32>} : memref<1x8x128xf32, #tpu.memory_space<vmem>>, vector<1x8x128xf32>,
    } else {
    }
    %37 = vector.shape_cast %23 : vector<128x128xf32> to vector<128x1x128xf32>
    %cst_18 = arith.constant dense<0.000000e+00> : vector<128x128xf32>
    %38 = vector.multi_reduction <add>, %37, %cst_18 [1] : vector<128x1x128xf32> to vector<128x128xf32>
    %39 = vector.shape_cast %38 : vector<128x128xf32> to vector<16x8x128xf32>
    %cst_19 = arith.constant dense<0.000000e+00> : vector<8x128xf32>
    %40 = vector.multi_reduction <add>, %39, %cst_19 [0] : vector<16x8x128xf32> to vector<8x128xf32>
    %cst_20 = arith.constant 2.000000e+00 : f32
    %cst_21 = arith.constant 1.000000e+00 : f32
    %41 = arith.select %34, %cst_20, %cst_21 : f32
    %c0_22 = arith.constant 0 : index
    %c0_23 = arith.constant 0 : index
    %42 = vector.load %arg9[%c0_22, %c0_23] : memref<8x128xf32, #tpu.memory_space<vmem>>, vector<8x128xf32>
    %43 = vector.broadcast %41 : f32 to vector<8x128xf32>
    %44 = arith.mulf %43, %40 : vector<8x128xf32>
    %45 = arith.addf %42, %44 : vector<8x128xf32>
    %c0_24 = arith.constant 0 : index
    %c0_25 = arith.constant 0 : index
    %46 = vector.load %arg9[%c0_24, %c0_25] : memref<8x128xf32, #tpu.memory_space<vmem>>, vector<8x128xf32>
    tpu.vector_store %arg9[%c0_24, %c0_25], %45 {strides = array<i32>} : memref<8x128xf32, #tpu.memory_space<vmem>>, vector<8x128xf32>,
    return
  }
  func.func @transform_0(%arg0: i32, %arg1: memref<1xi32, #tpu.memory_space<smem>>, %arg2: memref<1xi32, #tpu.memory_space<smem>>) -> (i32, i32) {
    %0 = arith.index_cast %arg0 : i32 to index
    %1 = memref.load %arg1[%0] : memref<1xi32, #tpu.memory_space<smem>>
    %c0_i32 = arith.constant 0 : i32
    %c0_i32_0 = arith.constant 0 : i32
    return %1, %c0_i32 : i32, i32
  }
  func.func @transform_1(%arg0: i32, %arg1: memref<1xi32, #tpu.memory_space<smem>>, %arg2: memref<1xi32, #tpu.memory_space<smem>>) -> (i32, i32) {
    %0 = arith.index_cast %arg0 : i32 to index
    %1 = memref.load %arg2[%0] : memref<1xi32, #tpu.memory_space<smem>>
    %c0_i32 = arith.constant 0 : i32
    %c0_i32_0 = arith.constant 0 : i32
    return %1, %c0_i32 : i32, i32
  }
  func.func @transform_2(%arg0: i32, %arg1: memref<1xi32, #tpu.memory_space<smem>>, %arg2: memref<1xi32, #tpu.memory_space<smem>>) -> (i32, i32) {
    %0 = arith.index_cast %arg0 : i32 to index
    %1 = memref.load %arg1[%0] : memref<1xi32, #tpu.memory_space<smem>>
    %c0_i32 = arith.constant 0 : i32
    %c0_i32_0 = arith.constant 0 : i32
    return %1, %c0_i32 : i32, i32
  }
  func.func @transform_3(%arg0: i32, %arg1: memref<1xi32, #tpu.memory_space<smem>>, %arg2: memref<1xi32, #tpu.memory_space<smem>>) -> (i32, i32) {
    %0 = arith.index_cast %arg0 : i32 to index
    %1 = memref.load %arg2[%0] : memref<1xi32, #tpu.memory_space<smem>>
    %c0_i32 = arith.constant 0 : i32
    %c0_i32_0 = arith.constant 0 : i32
    return %c0_i32, %1 : i32, i32
  }
  func.func @transform_4(%arg0: i32, %arg1: memref<1xi32, #tpu.memory_space<smem>>, %arg2: memref<1xi32, #tpu.memory_space<smem>>) -> (i32, i32, i32) {
    %c0_i32 = arith.constant 0 : i32
    %c0_i32_0 = arith.constant 0 : i32
    %c0_i32_1 = arith.constant 0 : i32
    %c0_i32_2 = arith.constant 0 : i32
    return %c0_i32, %c0_i32_0, %c0_i32_1 : i32, i32, i32
  }
  func.func @transform_5(%arg0: i32, %arg1: memref<1xi32, #tpu.memory_space<smem>>, %arg2: memref<1xi32, #tpu.memory_space<smem>>) -> (i32, i32, i32) {
    %c0_i32 = arith.constant 0 : i32
    %c0_i32_0 = arith.constant 0 : i32
    %c0_i32_1 = arith.constant 0 : i32
    %c0_i32_2 = arith.constant 0 : i32
    return %c0_i32, %c0_i32_0, %c0_i32_1 : i32, i32, i32
  }
  func.func @transform_6(%arg0: i32, %arg1: memref<1xi32, #tpu.memory_space<smem>>, %arg2: memref<1xi32, #tpu.memory_space<smem>>) -> (i32, i32) {
    %c0_i32 = arith.constant 0 : i32
    %c0_i32_0 = arith.constant 0 : i32
    %c0_i32_1 = arith.constant 0 : i32
    return %c0_i32, %c0_i32_0 : i32, i32
  }
}

</mosaic_0001>

<llo_original>
// kernel: tpu_custom_call.1
$region0: #{tpu_custom_call.1}
  #allocation0 [shape = 'u32[]', space=smem, size = 0x4, offset = 0x4, fixed_abs, tag = 'smem constant byte address 0x4 - core index']
  #allocation1 [shape = 'u32[72,128]{1,0:T(1,128)}', space=vmem, size = 0x9000, scoped, tag = 'internal scratch']
  #allocation2 [shape = 's32[1]{0}', space=sflag, size = 0x4, scoped, tag = 'scoped memory for tpu_custom_call.1']
  #allocation3 [shape = 's32[1]{0:T(128)S(6)}', space=smem, size = 0x200, scoped, tag = 'prefetched SMEM operand 0']
  #allocation4 [shape = 's32[1]{0:T(128)S(6)}', space=smem, size = 0x200, scoped, tag = 'prefetched SMEM operand 1']
  %s0 = inlined_call_operand.<no memory space> [shape: s32[1], index: 0, kind: input, shape index: {}]
  %s1 = inlined_call_operand.<no memory space> [shape: s32[1], index: 1, kind: input, shape index: {}]
  %s2 = inlined_call_operand.vmem [shape: f32[128,128], index: 2, kind: input, shape index: {}]
  %s3 = inlined_call_operand.hbm [shape: f32[128,128], index: 3, kind: input, shape index: {}]
  %s4 = inlined_call_operand.vmem [shape: s32[128,1], index: 4, kind: input, shape index: {}]
  %s5 = inlined_call_operand.vmem [shape: s32[1,128], index: 5, kind: input, shape index: {}]
  %s6 = inlined_call_operand.hbm [shape: f32[1,128,128], index: 6, kind: output, shape index: {0}]
  %s7 = inlined_call_operand.hbm [shape: f32[1,8,128], index: 7, kind: output, shape index: {1}]
  %s8 = inlined_call_operand.hbm [shape: f32[8,128], index: 8, kind: output, shape index: {2}]
  %9 = xla_tuple %s6, %s7, %s8
  %s10 = sld [smem:[#allocation0]]
  $region54: #{tpu_custom_call.1} parent=0
    _
  %s12 = ssub.s32 1, %s10
  %s13 = scalar_select 0, %s12, %s10
  %14 = sst [smem:[#allocation3]] %s0
  %15 = sst [smem:[#allocation4]] %s1
  $region1: #{tpu_custom_call.1} parent=0
    #allocation5 [shape = 'u8[65536]{0}', space=vmem, size = 0x10000, scoped, tag = 'input window, operand 3, single buffered']
    #allocation6 [shape = 's32[1]{0}', space=sflag, size = 0x4, scoped, tag = 'scoped memory for tpu_custom_call.1']
    #allocation7 [shape = 's32[1]{0}', space=sflag, size = 0x4, scoped, tag = 'scoped memory for tpu_custom_call.1']
    #allocation8 [shape = 'u8[65536]{0}', space=vmem, size = 0x10000, scoped, tag = 'output window, operand 0, single buffered']
    #allocation9 [shape = 'u8[4096]{0}', space=vmem, size = 0x1000, scoped, tag = 'output window, operand 1, single buffered']
    #allocation10 [shape = 's32[1]{0}', space=sflag, size = 0x4, scoped, tag = 'scoped memory for tpu_custom_call.1']
    #allocation11 [shape = 'u8[4096]{0}', space=vmem, size = 0x1000, scoped, tag = 'output window, operand 2, single buffered']
    %16 = vsyncpa [#allocation6], 0
    %17 = vsyncpa [#allocation7], 0
    %18 = vsyncpa [#allocation10], 0
    // Predicated region
    $region2: #{tpu_custom_call.1} parent=1 // pred_check
      _
    $region3: #{tpu_custom_call.1} parent=1 // pred_check_branch
      %20 = sbr.rel (0) target = $region5
    $region4: #{tpu_custom_call.1} parent=1 // pred_region
      %s21 = sld [smem:[#allocation3]]
      %s22 = smul.u32 16, %s21
      %p23 = scmp.lt.s32.totalorder %s22, 15
      %s24 = scalar_select %p23, %s22, 15
      %s25 = smul.addr %s24, 8
      %s26 = scalar_lea.vmem %s2, %s25
      %s27 = sld [smem:[#allocation3]]
      %s28 = smul.u32 16, %s27
    $region5: #{tpu_custom_call.1} parent=1 // pred_fallthru
      _
    // Predicated region
    $region6: #{tpu_custom_call.1} parent=1 // pred_check
      _
    $region7: #{tpu_custom_call.1} parent=1 // pred_check_branch
      %30 = sbr.rel (0) target = $region9
    $region8: #{tpu_custom_call.1} parent=1 // pred_region
      %s31 = sld [smem:[#allocation4]]
      %s32 = smul.u32 16, %s31
      %34 = vsyncadd [#allocation6], 0
      %s35 = smul.addr %s32, 8
      %s36 = scalar_lea.hbm %s3, %s35
      %s37 = sshll.u32 %s36, 4
      %s38 = int_to_ptr.hbm [resolvable:$true] %s37
      %s39 = sshll.u32 [#allocation5], 4
      %s40 = int_to_ptr.vmem [resolvable:$true] %s39
      %45 = dma.hbm_to_vmem [thread:$0]  %s38, 2048, %s40, [#allocation6], 128, 128, 8
    $region9: #{tpu_custom_call.1} parent=1 // pred_fallthru
      _
    // Predicated region
    $region10: #{tpu_custom_call.1} parent=1 // pred_check
      _
    $region11: #{tpu_custom_call.1} parent=1 // pred_check_branch
      %47 = sbr.rel (0) target = $region13
    $region12: #{tpu_custom_call.1} parent=1 // pred_region
      %s48 = sld [smem:[#allocation3]]
      %s49 = smul.u32 16, %s48
      %p50 = scmp.lt.s32.totalorder %s49, 15
      %s51 = scalar_select %p50, %s49, 15
      %s52 = smul.addr %s51, 8
      %s53 = scalar_lea.vmem %s4, %s52
      %s54 = sld [smem:[#allocation3]]
      %s55 = smul.u32 16, %s54
    $region13: #{tpu_custom_call.1} parent=1 // pred_fallthru
      _
    // Predicated region
    $region14: #{tpu_custom_call.1} parent=1 // pred_check
      _
    $region15: #{tpu_custom_call.1} parent=1 // pred_check_branch
      %57 = sbr.rel (0) target = $region17
    $region16: #{tpu_custom_call.1} parent=1 // pred_region
      %s58 = sld [smem:[#allocation4]]
      %p59 = scmp.lt.s32.totalorder %s58, 0
      %s60 = scalar_select %p59, %s58, 0
      %s61 = scalar_lea.vmem %s5, %s60
      %s62 = sld [smem:[#allocation4]]
    $region17: #{tpu_custom_call.1} parent=1 // pred_fallthru
      _
    // Predicated region
    $region18: #{tpu_custom_call.1} parent=1 // pred_check
      _
    $region19: #{tpu_custom_call.1} parent=1 // pred_check_branch
      %64 = sbr.rel (0) target = $region21
    $region20: #{tpu_custom_call.1} parent=1 // pred_region
      %66 = dma.done [#allocation6], 2048
    $region21: #{tpu_custom_call.1} parent=1 // pred_fallthru
      _
    %s67 = sld [smem:[#allocation3]]
    %s68 = smul.u32 16, %s67
    %p69 = scmp.lt.s32.totalorder %s68, 15
    %s70 = scalar_select %p69, %s68, 15
    %s71 = smul.addr %s70, 8
    %s72 = scalar_lea.vmem %s2, %s71
    %s73 = sld [smem:[#allocation3]]
    %s74 = smul.u32 16, %s73
    %p75 = scmp.lt.s32.totalorder %s74, 15
    %s76 = scalar_select %p75, %s74, 15
    %s77 = smul.addr %s76, 8
    %s78 = scalar_lea.vmem %s4, %s77
    %s79 = sld [smem:[#allocation4]]
    %p80 = scmp.lt.s32.totalorder %s79, 0
    %s81 = scalar_select %p80, %s79, 0
    %s82 = scalar_lea.vmem %s5, %s81
    %s83 = sld [smem:[#allocation3]]
    %s84 = smul.u32 16, %s83
    %p85 = scmp.lt.s32.totalorder %s84, 15
    %s86 = scalar_select %p85, %s84, 15
    %s87 = smul.addr %s86, 8
    %s88 = scalar_lea.vmem %s2, %s87
    %s89 = sld [smem:[#allocation3]]
    %s90 = smul.u32 16, %s89
    %s91 = sld [smem:[#allocation4]]
    %s92 = smul.u32 16, %s91
    %s93 = sld [smem:[#allocation3]]
    %s94 = smul.u32 16, %s93
    %p95 = scmp.lt.s32.totalorder %s94, 15
    %s96 = scalar_select %p95, %s94, 15
    %s97 = smul.addr %s96, 8
    %s98 = scalar_lea.vmem %s4, %s97
    %s99 = sld [smem:[#allocation3]]
    %s100 = smul.u32 16, %s99
    %s101 = sld [smem:[#allocation4]]
    %p102 = scmp.lt.s32.totalorder %s101, 0
    %s103 = scalar_select %p102, %s101, 0
    %s104 = scalar_lea.vmem %s5, %s103
    %s105 = sld [smem:[#allocation4]]
    %s106 = sld [smem:[#allocation3]]
    %s107 = sld [smem:[#allocation4]]
    %p108 = scmp.eq.s32.totalorder 0, 0
    // Predicated region
    $region22: #{tpu_custom_call.1} parent=1 // pred_check
      %p109 = pneg %p108
    $region23: #{tpu_custom_call.1} parent=1 // pred_check_branch
      %111 = sbr.rel (%p109) target = $region25
    $region24: #{tpu_custom_call.1} parent=1 // pred_region
      %112 = vst [vmem:[#allocation8] sm:$0xff] 0.0
      %113 = vst [vmem:[#allocation8 + $0x8] sm:$0xff] 0.0
      %114 = vst [vmem:[#allocation8 + $0x10] sm:$0xff] 0.0
      %115 = vst [vmem:[#allocation8 + $0x18] sm:$0xff] 0.0
      %116 = vst [vmem:[#allocation8 + $0x20] sm:$0xff] 0.0
      %117 = vst [vmem:[#allocation8 + $0x28] sm:$0xff] 0.0
      %118 = vst [vmem:[#allocation8 + $0x30] sm:$0xff] 0.0
      %119 = vst [vmem:[#allocation8 + $0x38] sm:$0xff] 0.0
      %120 = vst [vmem:[#allocation8 + $0x40] sm:$0xff] 0.0
      %121 = vst [vmem:[#allocation8 + $0x48] sm:$0xff] 0.0
      %122 = vst [vmem:[#allocation8 + $0x50] sm:$0xff] 0.0
      %123 = vst [vmem:[#allocation8 + $0x58] sm:$0xff] 0.0
      %124 = vst [vmem:[#allocation8 + $0x60] sm:$0xff] 0.0
      %125 = vst [vmem:[#allocation8 + $0x68] sm:$0xff] 0.0
      %126 = vst [vmem:[#allocation8 + $0x70] sm:$0xff] 0.0
      %127 = vst [vmem:[#allocation8 + $0x78] sm:$0xff] 0.0
      %128 = vst [vmem:[#allocation9] sm:$0xff] 0.0
      %129 = vst [vmem:[#allocation11] sm:$0xff] 0.0
    $region25: #{tpu_custom_call.1} parent=1 // pred_fallthru
      _
    %v130 = vld [vmem:[%s88] sm:$0xff]
    %v131 = vld [vmem:[%s88 + $0x8] sm:$0xff]
    %v132 = vld [vmem:[%s88 + $0x10] sm:$0xff]
    %v133 = vld [vmem:[%s88 + $0x18] sm:$0xff]
    %v134 = vld [vmem:[%s88 + $0x20] sm:$0xff]
    %v135 = vld [vmem:[%s88 + $0x28] sm:$0xff]
    %v136 = vld [vmem:[%s88 + $0x30] sm:$0xff]
    %v137 = vld [vmem:[%s88 + $0x38] sm:$0xff]
    %v138 = vld [vmem:[%s88 + $0x40] sm:$0xff]
    %v139 = vld [vmem:[%s88 + $0x48] sm:$0xff]
    %v140 = vld [vmem:[%s88 + $0x50] sm:$0xff]
    %v141 = vld [vmem:[%s88 + $0x58] sm:$0xff]
    %v142 = vld [vmem:[%s88 + $0x60] sm:$0xff]
    %v143 = vld [vmem:[%s88 + $0x68] sm:$0xff]
    %v144 = vld [vmem:[%s88 + $0x70] sm:$0xff]
    %v145 = vld [vmem:[%s88 + $0x78] sm:$0xff]
    %v146 = vld [vmem:[#allocation5] sm:$0xff]
    %v147 = vld [vmem:[#allocation5 + $0x8] sm:$0xff]
    %v148 = vld [vmem:[#allocation5 + $0x10] sm:$0xff]
    %v149 = vld [vmem:[#allocation5 + $0x18] sm:$0xff]
    %v150 = vld [vmem:[#allocation5 + $0x20] sm:$0xff]
    %v151 = vld [vmem:[#allocation5 + $0x28] sm:$0xff]
    %v152 = vld [vmem:[#allocation5 + $0x30] sm:$0xff]
    %v153 = vld [vmem:[#allocation5 + $0x38] sm:$0xff]
    %v154 = vld [vmem:[#allocation5 + $0x40] sm:$0xff]
    %v155 = vld [vmem:[#allocation5 + $0x48] sm:$0xff]
    %v156 = vld [vmem:[#allocation5 + $0x50] sm:$0xff]
    %v157 = vld [vmem:[#allocation5 + $0x58] sm:$0xff]
    %v158 = vld [vmem:[#allocation5 + $0x60] sm:$0xff]
    %v159 = vld [vmem:[#allocation5 + $0x68] sm:$0xff]
    %v160 = vld [vmem:[#allocation5 + $0x70] sm:$0xff]
    %v161 = vld [vmem:[#allocation5 + $0x78] sm:$0xff]
    %162 = vmatpush.xpose.msra.mxu0 %v161
    %163 = vmatpush.xpose.msra.mxu0 %v160
    %164 = vmatpush.xpose.msra.mxu0 %v159
    %165 = vmatpush.xpose.msra.mxu0 %v158
    %166 = vmatpush.xpose.msra.mxu0 %v157
    %167 = vmatpush.xpose.msra.mxu0 %v156
    %168 = vmatpush.xpose.msra.mxu0 %v155
    %169 = vmatpush.xpose.msra.mxu0 %v154
    %170 = vmatpush.xpose.msra.mxu0 %v153
    %171 = vmatpush.xpose.msra.mxu0 %v152
    %172 = vmatpush.xpose.msra.mxu0 %v151
    %173 = vmatpush.xpose.msra.mxu0 %v150
    %174 = vmatpush.xpose.msra.mxu0 %v149
    %175 = vmatpush.xpose.msra.mxu0 %v148
    %176 = vmatpush.xpose.msra.mxu0 %v147
    %177 = vmatpush.xpose.msra.mxu0 %v146
    %178 = vmatmul.f32.gmra.mxu0 %v130
    %v179 = vpop.f32.mrf.mxu0
    %v180 = vadd.f32 0.0, %v179
    %181 = vmatmul.f32.gmra.mxu0 %v131
    %v182 = vpop.f32.mrf.mxu0
    %v183 = vadd.f32 0.0, %v182
    %184 = vmatmul.f32.gmra.mxu0 %v132
    %v185 = vpop.f32.mrf.mxu0
    %v186 = vadd.f32 0.0, %v185
    %187 = vmatmul.f32.gmra.mxu0 %v133
    %v188 = vpop.f32.mrf.mxu0
    %v189 = vadd.f32 0.0, %v188
    %190 = vmatmul.f32.gmra.mxu0 %v134
    %v191 = vpop.f32.mrf.mxu0
    %v192 = vadd.f32 0.0, %v191
    %193 = vmatmul.f32.gmra.mxu0 %v135
    %v194 = vpop.f32.mrf.mxu0
    %v195 = vadd.f32 0.0, %v194
    %196 = vmatmul.f32.gmra.mxu0 %v136
    %v197 = vpop.f32.mrf.mxu0
    %v198 = vadd.f32 0.0, %v197
    %199 = vmatmul.f32.gmra.mxu0 %v137
    %v200 = vpop.f32.mrf.mxu0
    %v201 = vadd.f32 0.0, %v200
    %202 = vmatmul.f32.gmra.mxu0 %v138
    %v203 = vpop.f32.mrf.mxu0
    %v204 = vadd.f32 0.0, %v203
    %205 = vmatmul.f32.gmra.mxu0 %v139
    %v206 = vpop.f32.mrf.mxu0
    %v207 = vadd.f32 0.0, %v206
    %208 = vmatmul.f32.gmra.mxu0 %v140
    %v209 = vpop.f32.mrf.mxu0
    %v210 = vadd.f32 0.0, %v209
    %211 = vmatmul.f32.gmra.mxu0 %v141
    %v212 = vpop.f32.mrf.mxu0
    %v213 = vadd.f32 0.0, %v212
    %214 = vmatmul.f32.gmra.mxu0 %v142
    %v215 = vpop.f32.mrf.mxu0
    %v216 = vadd.f32 0.0, %v215
    %217 = vmatmul.f32.gmra.mxu0 %v143
    %v218 = vpop.f32.mrf.mxu0
    %v219 = vadd.f32 0.0, %v218
    %220 = vmatmul.f32.gmra.mxu0 %v144
    %v221 = vpop.f32.mrf.mxu0
    %v222 = vadd.f32 0.0, %v221
    %223 = vmatmul.f32.gmra.mxu0 %v145
    %v224 = vpop.f32.mrf.mxu0
    %v225 = vadd.f32 0.0, %v224
    %226 = vdwg.mxu0
    %v227 = vmul.f32 %v180, 14.285714
    %v228 = vmul.f32 %v183, 14.285714
    %v229 = vmul.f32 %v186, 14.285714
    %v230 = vmul.f32 %v189, 14.285714
    %v231 = vmul.f32 %v192, 14.285714
    %v232 = vmul.f32 %v195, 14.285714
    %v233 = vmul.f32 %v198, 14.285714
    %v234 = vmul.f32 %v201, 14.285714
    %v235 = vmul.f32 %v204, 14.285714
    %v236 = vmul.f32 %v207, 14.285714
    %v237 = vmul.f32 %v210, 14.285714
    %v238 = vmul.f32 %v213, 14.285714
    %v239 = vmul.f32 %v216, 14.285714
    %v240 = vmul.f32 %v219, 14.285714
    %v241 = vmul.f32 %v222, 14.285714
    %v242 = vmul.f32 %v225, 14.285714
    %v243 = vmax.f32 %v227, -20.0
    %v244 = vmax.f32 %v228, -20.0
    %v245 = vmax.f32 %v229, -20.0
    %v246 = vmax.f32 %v230, -20.0
    %v247 = vmax.f32 %v231, -20.0
    %v248 = vmax.f32 %v232, -20.0
    %v249 = vmax.f32 %v233, -20.0
    %v250 = vmax.f32 %v234, -20.0
    %v251 = vmax.f32 %v235, -20.0
    %v252 = vmax.f32 %v236, -20.0
    %v253 = vmax.f32 %v237, -20.0
    %v254 = vmax.f32 %v238, -20.0
    %v255 = vmax.f32 %v239, -20.0
    %v256 = vmax.f32 %v240, -20.0
    %v257 = vmax.f32 %v241, -20.0
    %v258 = vmax.f32 %v242, -20.0
    %v259 = vld [vmem:[%s98] sm:$0xff]
    %v260 = vld [vmem:[%s98 + $0x8] sm:$0xff]
    %v261 = vld [vmem:[%s98 + $0x10] sm:$0xff]
    %v262 = vld [vmem:[%s98 + $0x18] sm:$0xff]
    %v263 = vld [vmem:[%s98 + $0x20] sm:$0xff]
    %v264 = vld [vmem:[%s98 + $0x28] sm:$0xff]
    %v265 = vld [vmem:[%s98 + $0x30] sm:$0xff]
    %v266 = vld [vmem:[%s98 + $0x38] sm:$0xff]
    %v267 = vld [vmem:[%s98 + $0x40] sm:$0xff]
    %v268 = vld [vmem:[%s98 + $0x48] sm:$0xff]
    %v269 = vld [vmem:[%s98 + $0x50] sm:$0xff]
    %v270 = vld [vmem:[%s98 + $0x58] sm:$0xff]
    %v271 = vld [vmem:[%s98 + $0x60] sm:$0xff]
    %v272 = vld [vmem:[%s98 + $0x68] sm:$0xff]
    %v273 = vld [vmem:[%s98 + $0x70] sm:$0xff]
    %v274 = vld [vmem:[%s98 + $0x78] sm:$0xff]
    %v275 = vld [vmem:[%s104] sm:$0x1]
    %276 = vset.pattern.permute.xlu0 0
    %277 = vperm.xlu0 %276, %v259
    %v278 = vpop.permute.xlu0 %277
    %279 = vset.pattern.permute.xlu0 0
    %280 = vperm.xlu0 %279, %v260
    %v281 = vpop.permute.xlu0 %280
    %282 = vset.pattern.permute.xlu0 0
    %283 = vperm.xlu0 %282, %v261
    %v284 = vpop.permute.xlu0 %283
    %285 = vset.pattern.permute.xlu0 0
    %286 = vperm.xlu0 %285, %v262
    %v287 = vpop.permute.xlu0 %286
    %288 = vset.pattern.permute.xlu0 0
    %289 = vperm.xlu0 %288, %v263
    %v290 = vpop.permute.xlu0 %289
    %291 = vset.pattern.permute.xlu0 0
    %292 = vperm.xlu0 %291, %v264
    %v293 = vpop.permute.xlu0 %292
    %294 = vset.pattern.permute.xlu0 0
    %295 = vperm.xlu0 %294, %v265
    %v296 = vpop.permute.xlu0 %295
    %297 = vset.pattern.permute.xlu0 0
    %298 = vperm.xlu0 %297, %v266
    %v299 = vpop.permute.xlu0 %298
    %300 = vset.pattern.permute.xlu0 0
    %301 = vperm.xlu0 %300, %v267
    %v302 = vpop.permute.xlu0 %301
    %303 = vset.pattern.permute.xlu0 0
    %304 = vperm.xlu0 %303, %v268
    %v305 = vpop.permute.xlu0 %304
    %306 = vset.pattern.permute.xlu0 0
    %307 = vperm.xlu0 %306, %v269
    %v308 = vpop.permute.xlu0 %307
    %309 = vset.pattern.permute.xlu0 0
    %310 = vperm.xlu0 %309, %v270
    %v311 = vpop.permute.xlu0 %310
    %312 = vset.pattern.permute.xlu0 0
    %313 = vperm.xlu0 %312, %v271
    %v314 = vpop.permute.xlu0 %313
    %315 = vset.pattern.permute.xlu0 0
    %316 = vperm.xlu0 %315, %v272
    %v317 = vpop.permute.xlu0 %316
    %318 = vset.pattern.permute.xlu0 0
    %319 = vperm.xlu0 %318, %v273
    %v320 = vpop.permute.xlu0 %319
    %321 = vset.pattern.permute.xlu0 0
    %322 = vperm.xlu0 %321, %v274
    %v323 = vpop.permute.xlu0 %322
    %v324 = vperm.slane %v275, 0
    %vm325 = vcmp.eq.s32.totalorder %v278, %v324
    %vm326 = vcmp.eq.s32.totalorder %v281, %v324
    %vm327 = vcmp.eq.s32.totalorder %v284, %v324
    %vm328 = vcmp.eq.s32.totalorder %v287, %v324
    %vm329 = vcmp.eq.s32.totalorder %v290, %v324
    %vm330 = vcmp.eq.s32.totalorder %v293, %v324
    %vm331 = vcmp.eq.s32.totalorder %v296, %v324
    %vm332 = vcmp.eq.s32.totalorder %v299, %v324
    %vm333 = vcmp.eq.s32.totalorder %v302, %v324
    %vm334 = vcmp.eq.s32.totalorder %v305, %v324
    %vm335 = vcmp.eq.s32.totalorder %v308, %v324
    %vm336 = vcmp.eq.s32.totalorder %v311, %v324
    %vm337 = vcmp.eq.s32.totalorder %v314, %v324
    %vm338 = vcmp.eq.s32.totalorder %v317, %v324
    %vm339 = vcmp.eq.s32.totalorder %v320, %v324
    %vm340 = vcmp.eq.s32.totalorder %v323, %v324
    %v341 = vmul.f32 %v243, 1.442695
    %v342 = vpow.pop %v341
    %v343 = vmul.f32 %v244, 1.442695
    %v344 = vpow.pop %v343
    %v345 = vmul.f32 %v245, 1.442695
    %v346 = vpow.pop %v345
    %v347 = vmul.f32 %v246, 1.442695
    %v348 = vpow.pop %v347
    %v349 = vmul.f32 %v247, 1.442695
    %v350 = vpow.pop %v349
    %v351 = vmul.f32 %v248, 1.442695
    %v352 = vpow.pop %v351
    %v353 = vmul.f32 %v249, 1.442695
    %v354 = vpow.pop %v353
    %v355 = vmul.f32 %v250, 1.442695
    %v356 = vpow.pop %v355
    %v357 = vmul.f32 %v251, 1.442695
    %v358 = vpow.pop %v357
    %v359 = vmul.f32 %v252, 1.442695
    %v360 = vpow.pop %v359
    %v361 = vmul.f32 %v253, 1.442695
    %v362 = vpow.pop %v361
    %v363 = vmul.f32 %v254, 1.442695
    %v364 = vpow.pop %v363
    %v365 = vmul.f32 %v255, 1.442695
    %v366 = vpow.pop %v365
    %v367 = vmul.f32 %v256, 1.442695
    %v368 = vpow.pop %v367
    %v369 = vmul.f32 %v257, 1.442695
    %v370 = vpow.pop %v369
    %v371 = vmul.f32 %v258, 1.442695
    %v372 = vpow.pop %v371
    %v373 = vsel %vm325, 1.0, %v342
    %v374 = vsel %vm326, 1.0, %v344
    %v375 = vsel %vm327, 1.0, %v346
    %v376 = vsel %vm328, 1.0, %v348
    %v377 = vsel %vm329, 1.0, %v350
    %v378 = vsel %vm330, 1.0, %v352
    %v379 = vsel %vm331, 1.0, %v354
    %v380 = vsel %vm332, 1.0, %v356
    %v381 = vsel %vm333, 1.0, %v358
    %v382 = vsel %vm334, 1.0, %v360
    %v383 = vsel %vm335, 1.0, %v362
    %v384 = vsel %vm336, 1.0, %v364
    %v385 = vsel %vm337, 1.0, %v366
    %v386 = vsel %vm338, 1.0, %v368
    %v387 = vsel %vm339, 1.0, %v370
    %v388 = vsel %vm340, 1.0, %v372
    %v389 = vsel %vm325, %v243, 0.0
    %v390 = vsel %vm326, %v244, 0.0
    %v391 = vsel %vm327, %v245, 0.0
    %v392 = vsel %vm328, %v246, 0.0
    %v393 = vsel %vm329, %v247, 0.0
    %v394 = vsel %vm330, %v248, 0.0
    %v395 = vsel %vm331, %v249, 0.0
    %v396 = vsel %vm332, %v250, 0.0
    %v397 = vsel %vm333, %v251, 0.0
    %v398 = vsel %vm334, %v252, 0.0
    %v399 = vsel %vm335, %v253, 0.0
    %v400 = vsel %vm336, %v254, 0.0
    %v401 = vsel %vm337, %v255, 0.0
    %v402 = vsel %vm338, %v256, 0.0
    %v403 = vsel %vm339, %v257, 0.0
    %v404 = vsel %vm340, %v258, 0.0
    %v405 = vadd.f32 %v373, 0.0
    %v406 = vadd.f32 %v374, 0.0
    %v407 = vadd.f32 %v375, 0.0
    %v408 = vadd.f32 %v376, 0.0
    %v409 = vadd.f32 %v377, 0.0
    %v410 = vadd.f32 %v378, 0.0
    %v411 = vadd.f32 %v379, 0.0
    %v412 = vadd.f32 %v380, 0.0
    %v413 = vadd.f32 %v381, 0.0
    %v414 = vadd.f32 %v382, 0.0
    %v415 = vadd.f32 %v383, 0.0
    %v416 = vadd.f32 %v384, 0.0
    %v417 = vadd.f32 %v385, 0.0
    %v418 = vadd.f32 %v386, 0.0
    %v419 = vadd.f32 %v387, 0.0
    %v420 = vadd.f32 %v388, 0.0
    %s421 = smul.u32 %s106, 128
    %s422 = scalar_lea.vmem [#allocation8], %s421
    %v423 = vld [vmem:[%s422] sm:$0xff]
    %v424 = vld [vmem:[%s422 + $0x8] sm:$0xff]
    %v425 = vld [vmem:[%s422 + $0x10] sm:$0xff]
    %v426 = vld [vmem:[%s422 + $0x18] sm:$0xff]
    %v427 = vld [vmem:[%s422 + $0x20] sm:$0xff]
    %v428 = vld [vmem:[%s422 + $0x28] sm:$0xff]
    %v429 = vld [vmem:[%s422 + $0x30] sm:$0xff]
    %v430 = vld [vmem:[%s422 + $0x38] sm:$0xff]
    %v431 = vld [vmem:[%s422 + $0x40] sm:$0xff]
    %v432 = vld [vmem:[%s422 + $0x48] sm:$0xff]
    %v433 = vld [vmem:[%s422 + $0x50] sm:$0xff]
    %v434 = vld [vmem:[%s422 + $0x58] sm:$0xff]
    %v435 = vld [vmem:[%s422 + $0x60] sm:$0xff]
    %v436 = vld [vmem:[%s422 + $0x68] sm:$0xff]
    %v437 = vld [vmem:[%s422 + $0x70] sm:$0xff]
    %v438 = vld [vmem:[%s422 + $0x78] sm:$0xff]
    %v439 = vadd.f32 %v423, %v405
    %v440 = vadd.f32 %v424, %v406
    %v441 = vadd.f32 %v425, %v407
    %v442 = vadd.f32 %v426, %v408
    %v443 = vadd.f32 %v427, %v409
    %v444 = vadd.f32 %v428, %v410
    %v445 = vadd.f32 %v429, %v411
    %v446 = vadd.f32 %v430, %v412
    %v447 = vadd.f32 %v431, %v413
    %v448 = vadd.f32 %v432, %v414
    %v449 = vadd.f32 %v433, %v415
    %v450 = vadd.f32 %v434, %v416
    %v451 = vadd.f32 %v435, %v417
    %v452 = vadd.f32 %v436, %v418
    %v453 = vadd.f32 %v437, %v419
    %v454 = vadd.f32 %v438, %v420
    %455 = vst [vmem:[%s422] sm:$0xff] %v439
    %456 = vst [vmem:[%s422 + $0x8] sm:$0xff] %v440
    %457 = vst [vmem:[%s422 + $0x10] sm:$0xff] %v441
    %458 = vst [vmem:[%s422 + $0x18] sm:$0xff] %v442
    %459 = vst [vmem:[%s422 + $0x20] sm:$0xff] %v443
    %460 = vst [vmem:[%s422 + $0x28] sm:$0xff] %v444
    %461 = vst [vmem:[%s422 + $0x30] sm:$0xff] %v445
    %462 = vst [vmem:[%s422 + $0x38] sm:$0xff] %v446
    %463 = vst [vmem:[%s422 + $0x40] sm:$0xff] %v447
    %464 = vst [vmem:[%s422 + $0x48] sm:$0xff] %v448
    %465 = vst [vmem:[%s422 + $0x50] sm:$0xff] %v449
    %466 = vst [vmem:[%s422 + $0x58] sm:$0xff] %v450
    %467 = vst [vmem:[%s422 + $0x60] sm:$0xff] %v451
    %468 = vst [vmem:[%s422 + $0x68] sm:$0xff] %v452
    %469 = vst [vmem:[%s422 + $0x70] sm:$0xff] %v453
    %470 = vst [vmem:[%s422 + $0x78] sm:$0xff] %v454
    %p471 = scmp.ne.s32.totalorder %s106, %s107
    // Predicated region
    $region26: #{tpu_custom_call.1} parent=1 // pred_check
      %p472 = pneg %p471
    $region27: #{tpu_custom_call.1} parent=1 // pred_check_branch
      %474 = sbr.rel (%p472) target = $region29
    $region28: #{tpu_custom_call.1} parent=1 // pred_region
      %v475 = vadd.f32 %v373, %v374
      %v476 = vadd.f32 %v475, %v375
      %v477 = vadd.f32 %v476, %v376
      %v478 = vadd.f32 %v477, %v377
      %v479 = vadd.f32 %v478, %v378
      %v480 = vadd.f32 %v479, %v379
      %v481 = vadd.f32 %v480, %v380
      %v482 = vadd.f32 %v481, %v381
      %v483 = vadd.f32 %v482, %v382
      %v484 = vadd.f32 %v483, %v383
      %v485 = vadd.f32 %v484, %v384
      %v486 = vadd.f32 %v485, %v385
      %v487 = vadd.f32 %v486, %v386
      %v488 = vadd.f32 %v487, %v387
      %v489 = vadd.f32 %v488, %v388
      %s490 = smul.u32 %s107, 8
      %s491 = scalar_lea.vmem [#allocation9], %s490
      %v492 = vld [vmem:[%s491] sm:$0xff]
      %v493 = vadd.f32 %v492, %v489
      %494 = vst [vmem:[%s491] sm:$0xff] %v493
    $region29: #{tpu_custom_call.1} parent=1 // pred_fallthru
      _
    %v495 = vadd.f32 %v389, 0.0
    %v496 = vadd.f32 %v390, 0.0
    %v497 = vadd.f32 %v391, 0.0
    %v498 = vadd.f32 %v392, 0.0
    %v499 = vadd.f32 %v393, 0.0
    %v500 = vadd.f32 %v394, 0.0
    %v501 = vadd.f32 %v395, 0.0
    %v502 = vadd.f32 %v396, 0.0
    %v503 = vadd.f32 %v397, 0.0
    %v504 = vadd.f32 %v398, 0.0
    %v505 = vadd.f32 %v399, 0.0
    %v506 = vadd.f32 %v400, 0.0
    %v507 = vadd.f32 %v401, 0.0
    %v508 = vadd.f32 %v402, 0.0
    %v509 = vadd.f32 %v403, 0.0
    %v510 = vadd.f32 %v404, 0.0
    %v511 = vadd.f32 %v495, %v496
    %v512 = vadd.f32 %v511, %v497
    %v513 = vadd.f32 %v512, %v498
    %v514 = vadd.f32 %v513, %v499
    %v515 = vadd.f32 %v514, %v500
    %v516 = vadd.f32 %v515, %v501
    %v517 = vadd.f32 %v516, %v502
    %v518 = vadd.f32 %v517, %v503
    %v519 = vadd.f32 %v518, %v504
    %v520 = vadd.f32 %v519, %v505
    %v521 = vadd.f32 %v520, %v506
    %v522 = vadd.f32 %v521, %v507
    %v523 = vadd.f32 %v522, %v508
    %v524 = vadd.f32 %v523, %v509
    %v525 = vadd.f32 %v524, %v510
    %s526 = scalar_select %p471, 2.0, 1.0
    %v527 = vld [vmem:[#allocation11] sm:$0xff]
    %v528 = vstv %s526
    %v529 = vmul.f32 %v528, %v525
    %v530 = vadd.f32 %v527, %v529
    %531 = vst [vmem:[#allocation11] sm:$0xff] %v530
    // Predicated region
    $region30: #{tpu_custom_call.1} parent=1 // pred_check
      _
    $region31: #{tpu_custom_call.1} parent=1 // pred_check_branch
      %533 = sbr.rel (0) target = $region33
    $region32: #{tpu_custom_call.1} parent=1 // pred_region
      %535 = vsyncadd [#allocation7], 0
      %s536 = sshll.u32 [#allocation8], 4
      %s537 = int_to_ptr.vmem [resolvable:$true] %s536
      %s538 = sshll.u32 %s6, 4
      %s539 = int_to_ptr.hbm [resolvable:$true] %s538
      %544 = dma.vmem_to_hbm [thread:$0]  %s537, 2048, %s539, [#allocation7], 128, 128, 8
    $region33: #{tpu_custom_call.1} parent=1 // pred_fallthru
      _
    // Predicated region
    $region34: #{tpu_custom_call.1} parent=1 // pred_check
      _
    $region35: #{tpu_custom_call.1} parent=1 // pred_check_branch
      %546 = sbr.rel (0) target = $region37
    $region36: #{tpu_custom_call.1} parent=1 // pred_region
      %548 = vsyncadd [#allocation10], 0
      %s550 = sshll.u32 [#allocation9], 4
      %s551 = int_to_ptr.vmem [resolvable:$true] %s550
      %s552 = sshll.u32 %s7, 4
      %s553 = int_to_ptr.hbm [resolvable:$true] %s552
      %555 = dma.vmem_to_hbm [thread:$0]  %s551, 128, %s553, [#allocation10]
    $region37: #{tpu_custom_call.1} parent=1 // pred_fallthru
      _
    // Predicated region
    $region38: #{tpu_custom_call.1} parent=1 // pred_check
      _
    $region39: #{tpu_custom_call.1} parent=1 // pred_check_branch
      %557 = sbr.rel (0) target = $region41
    $region40: #{tpu_custom_call.1} parent=1 // pred_region
      %559 = vsyncadd [#allocation10], 0
      %s561 = sshll.u32 [#allocation11], 4
      %s562 = int_to_ptr.vmem [resolvable:$true] %s561
      %s563 = sshll.u32 %s8, 4
      %s564 = int_to_ptr.hbm [resolvable:$true] %s563
      %566 = dma.vmem_to_hbm [thread:$0]  %s562, 128, %s564, [#allocation10]
    $region41: #{tpu_custom_call.1} parent=1 // pred_fallthru
      _
    // Predicated region
    $region42: #{tpu_custom_call.1} parent=1 // pred_check
      _
    $region43: #{tpu_custom_call.1} parent=1 // pred_check_branch
      %568 = sbr.rel (0) target = $region45
    $region44: #{tpu_custom_call.1} parent=1 // pred_region
      %570 = dma.done [#allocation7], 2048
    $region45: #{tpu_custom_call.1} parent=1 // pred_fallthru
      _
    // Predicated region
    $region46: #{tpu_custom_call.1} parent=1 // pred_check
      _
    $region47: #{tpu_custom_call.1} parent=1 // pred_check_branch
      %572 = sbr.rel (0) target = $region49
    $region48: #{tpu_custom_call.1} parent=1 // pred_region
      %574 = dma.done [#allocation10], 128
    $region49: #{tpu_custom_call.1} parent=1 // pred_fallthru
      _
    // Predicated region
    $region50: #{tpu_custom_call.1} parent=1 // pred_check
      _
    $region51: #{tpu_custom_call.1} parent=1 // pred_check_branch
      %576 = sbr.rel (0) target = $region53
    $region52: #{tpu_custom_call.1} parent=1 // pred_region
      %578 = dma.done [#allocation10], 128
    $region53: #{tpu_custom_call.1} parent=1 // pred_fallthru
      _
    %579 = vsyncpa [#allocation6], 1
    %580 = vsyncpa [#allocation7], 1
    %581 = vsyncpa [#allocation10], 1

</llo_original>
